<compile_context>
chip_gen: v7x
topology: tpu7x:2x2x1
jax: 0.10.0
libtpu: 0.0.40
codegen_flags: <defaults>
</compile_context>

<pallas_src>
import jax
import jax.numpy as jnp
from jax.experimental import pallas as pl
from jax.experimental.pallas import tpu as pltpu

LANE = 128
_UNROLL_MAX = 32


def _physical_vmem_bytes():
    """Generation-aware VMEM capacity (falls back to the v7x 64 MiB floor)."""
    try:
        info = pltpu.get_tpu_info()
        cap = getattr(info, "vmem_capacity_bytes", None)
        if cap:
            return int(cap)
    except Exception:
        pass
    return 64 * 1024 * 1024


def _make_se1_kernel(rows_tile, t_hw, chunk, num_chunks, grid_h, rem_last, out_scale):
    mask_needed = rem_last != t_hw   # last spatial block is partial (garbage tail)

    def se1_kernel(x_ref, sel_ref, wexp_ref, o_ref, acc_ref):
        # x_ref:    (rows_tile, t_hw)    native dtype, streamed HBM->VMEM
        # sel_ref:  (tn, rows_tile)      f32 block-diagonal row->batch selector
        # wexp_ref: (rows_tile, C_out)   f32 1x1-conv weight per row, 1/(H*W) folded
        # o_ref:    (tn, C_out)
        # acc_ref:  (rows_tile, chunk)   f32 lane-wise partial-sum accumulator
        h = pl.program_id(1)

        @pl.when(h == 0)
        def _():
            acc_ref[...] = jnp.zeros_like(acc_ref)

        if mask_needed:
            # Hoisted once per step: lane positions + valid-lane limit for this block.
            lane_idx = jax.lax.broadcasted_iota(jnp.int32, (rows_tile, chunk), 1)
            limit = jnp.where(h == grid_h - 1, rem_last, t_hw)

        zero = jnp.zeros((rows_tile, chunk), jnp.float32)
        if num_chunks <= _UNROLL_MAX:
            partial = zero
            for j in range(num_chunks):
                c = x_ref[:, j * chunk:(j + 1) * chunk].astype(jnp.float32)
                # Only chunks that can overlap the ragged tail pay the mask.
                if mask_needed and (j + 1) * chunk > rem_last:
                    c = jnp.where(j * chunk + lane_idx < limit, c, 0.0)
                partial = partial + c
        else:
            def body(j, partial):
                start = pl.multiple_of(j * chunk, chunk)
                c = x_ref[:, pl.ds(start, chunk)].astype(jnp.float32)
                if mask_needed:
                    c = jnp.where(j * chunk + lane_idx < limit, c, 0.0)
                return partial + c

            partial = jax.lax.fori_loop(0, num_chunks, body, zero)

        acc_ref[...] += partial

        @pl.when(h == grid_h - 1)
        def _():
            # Single cross-lane reduce + tiny matmul + sigmoid, once per batch tile.
            s = jnp.sum(acc_ref[...], axis=-1, keepdims=True)        # (rows_tile, 1)
            contrib = s * wexp_ref[...]                               # (rows_tile, C_out)
            logits = jnp.dot(sel_ref[...], contrib,
                             preferred_element_type=jnp.float32)      # (tn, C_out)
            y = jax.nn.sigmoid(logits)
            if out_scale != 1.0:                                      # ver == 2
                y = out_scale * y
            o_ref[...] = y.astype(o_ref.dtype)

    return se1_kernel


def se1_forward(x_nchw, weight, ver=1):
    """SE1: global avg-pool -> 1x1 conv (no bias) -> sigmoid [-> *2 if ver==2].

    x_nchw: (N, C_in, H, W); weight: (C_out, C_in, 1, 1) as in nn.Conv2d."""
    N, C_in, H, W = x_nchw.shape
    C_out = weight.shape[0]
    HW = H * W
    itemsize = jnp.dtype(x_nchw.dtype).itemsize

    # ---- batch tile --------------------------------------------------------
    # Output block (tn, C_out): tn must be a multiple of 8 or the full batch.
    # Guardrail: large ragged N gets padded to a multiple of 8 (one-off leading
    # dim pad) so the accumulator / input block stays VMEM-bounded.
    N_pad = N
    if N % 8 == 0:
        tn = 8
    elif N <= 16:
        tn = N
    else:
        N_pad = pl.cdiv(N, 8) * 8
        tn = 8
    rows_tile = tn * C_in
    grid_n = (N_pad * C_in) // rows_tile

    # ---- spatial tile (generation-aware, double-buffered) -------------------
    vmem_cap = _physical_vmem_bytes()
    per_block_cap = (16 << 20) if vmem_cap >= (128 << 20) else (7 << 20)
    fixed_bytes = (rows_tile * LANE * 4            # f32 accumulator scratch
                   + 2 * tn * rows_tile * 4        # sel (double-buffered)
                   + 2 * rows_tile * C_out * 4     # wexp
                   + 2 * tn * C_out * itemsize)    # output block
    per_block = min(per_block_cap,
                    max(rows_tile * LANE * itemsize,
                        (vmem_cap * 3 // 4 - fixed_bytes) // 2))

    if HW < LANE:
        t_hw = HW           # single exact block (full dim), no masking needed
        chunk = HW
    else:
        t_hw_budget = max(LANE, (per_block // (rows_tile * itemsize)) // LANE * LANE)
        t_hw = min((HW // LANE) * LANE, t_hw_budget)   # always a multiple of 128
        chunk = LANE
    grid_h = pl.cdiv(HW, t_hw)
    rem_last = HW - (grid_h - 1) * t_hw                # valid lanes in last block
    num_chunks = t_hw // chunk

    # ---- operands: no HBM copy of x (reshape only), tail masked in-kernel ---
    x_flat = x_nchw.reshape(N * C_in, HW)
    if N_pad != N:
        x_flat = jnp.pad(x_flat, ((0, (N_pad - N) * C_in), (0, 0)))

    w2d = weight.reshape(C_out, C_in).astype(jnp.float32).T        # (C_in, C_out)
    # Fold 1/(H*W) into the weight; tile per batch row so the finalize needs no
    # in-kernel reshape: out = sel @ (row_sums * wexp).
    wexp = jnp.tile(w2d * (1.0 / float(HW)), (tn, 1))              # (rows_tile, C_out)
    sel = (jnp.arange(tn, dtype=jnp.int32)[:, None]
           == (jnp.arange(rows_tile, dtype=jnp.int32)[None, :] // C_in)
           ).astype(jnp.float32)                                   # (tn, rows_tile)

    kernel = _make_se1_kernel(rows_tile, t_hw, chunk, num_chunks, grid_h,
                              rem_last, 2.0 if ver == 2 else 1.0)

    block_bytes = rows_tile * t_hw * itemsize
    need = 2 * block_bytes + fixed_bytes + (4 << 20)
    vmem_limit = int(min(max(need, 32 << 20), vmem_cap - (8 << 20)))

    out = pl.pallas_call(
        kernel,
        out_shape=jax.ShapeDtypeStruct((N_pad, C_out), x_nchw.dtype),
        grid_spec=pltpu.PrefetchScalarGridSpec(
            num_scalar_prefetch=0,
            grid=(grid_n, grid_h),                     # spatial reduction axis last
            in_specs=[
                pl.BlockSpec((rows_tile, t_hw), lambda n, h: (n, h)),
                pl.BlockSpec((tn, rows_tile), lambda n, h: (0, 0)),
                pl.BlockSpec((rows_tile, C_out), lambda n, h: (0, 0)),
            ],
            out_specs=pl.BlockSpec((tn, C_out), lambda n, h: (n, 0)),
            scratch_shapes=[pltpu.VMEM((rows_tile, chunk), jnp.float32)],
        ),
        compiler_params=pltpu.CompilerParams(
            dimension_semantics=("parallel", "arbitrary"),
            vmem_limit_bytes=vmem_limit,
        ),
    )(x_flat, sel, wexp)

    if N_pad != N:
        out = out[:N]
    return out.reshape(N, C_out, 1, 1)


def se1_reference(x_nchw, weight, ver=1):
    pooled = jnp.mean(x_nchw.astype(jnp.float32), axis=(2, 3))      # (N, C_in)
    w2d = weight.reshape(weight.shape[0], weight.shape[1]).astype(jnp.float32)
    y = jax.nn.sigmoid(pooled @ w2d.T)
    if ver == 2:
        y = 2.0 * y
    return y.astype(x_nchw.dtype).reshape(x_nchw.shape[0], weight.shape[0], 1, 1)


def _rand_weight(key, c_out, c_in):
    bound = (1.0 / c_in) ** 0.5
    return jax.random.uniform(key, (c_out, c_in, 1, 1),
                              minval=-bound, maxval=bound, dtype=jnp.float32)


if __name__ == "__main__":
    key = jax.random.PRNGKey(0)
    k1x, k1w, k2x, k2w, k3x, k3w = jax.random.split(key, 6)

    # --- test 1: module-sized shapes, ver=1 (tn=N path, exact spatial tiling) ---
    N, C_in, H, W, C_out = 2, 4, 16, 16, 4
    x = jax.random.normal(k1x, (N, C_in, H, W), dtype=jnp.float32)
    w = _rand_weight(k1w, C_out, C_in)
    out = jax.block_until_ready(se1_forward(x, w, ver=1))
    ref = se1_reference(x, w, ver=1)
    assert out.shape == (N, C_out, 1, 1)
    assert jnp.allclose(out, ref, atol=1e-5, rtol=1e-5)

    # --- test 2: HW < 128 (single exact block), tn=8, ver=2 ---
    N2, C2_in, H2, W2, C2_out = 8, 16, 9, 9, 8
    x2 = jax.random.normal(k2x, (N2, C2_in, H2, W2), dtype=jnp.float32)
    w2 = _rand_weight(k2w, C2_out, C2_in)
    out2 = jax.block_until_ready(se1_forward(x2, w2, ver=2))
    ref2 = se1_reference(x2, w2, ver=2)
    assert out2.shape == (N2, C2_out, 1, 1)
    assert jnp.allclose(out2, ref2, atol=1e-5, rtol=1e-5)

    # --- test 3: ragged spatial tail (HW=169 -> 2 blocks, last masked), ver=1 ---
    N3, C3_in, H3, W3, C3_out = 8, 8, 13, 13, 8
    x3 = jax.random.normal(k3x, (N3, C3_in, H3, W3), dtype=jnp.float32)
    w3 = _rand_weight(k3w, C3_out, C3_in)
    out3 = jax.block_until_ready(se1_forward(x3, w3, ver=1))
    ref3 = se1_reference(x3, w3, ver=1)
    assert out3.shape == (N3, C3_out, 1, 1)
    assert jnp.allclose(out3, ref3, atol=1e-5, rtol=1e-5)

    print("KERNEL_OK")
</pallas_src>

<mosaic_0001>
module attributes {stable_mosaic.version = 11 : i64} {
  func.func @se1_kernel(%arg0: i32, %arg1: i32, %arg2: memref<8x256xf32, #tpu.memory_space<vmem>>, %arg3: memref<2x8xf32, #tpu.memory_space<vmem>>, %arg4: memref<8x4xf32, #tpu.memory_space<vmem>>, %arg5: memref<2x4xf32, #tpu.memory_space<vmem>>, %arg6: memref<8x128xf32, #tpu.memory_space<vmem>>) attributes {dimension_semantics = [#tpu.dimension_semantics<parallel>, #tpu.dimension_semantics<arbitrary>], iteration_bounds = array<i64: 1, 1>, scalar_prefetch = 0 : i64, scratch_operands = 1 : i64, tpu.core_type = #tpu.core_type<tc>, window_params = [{transform_indices = @transform_0, window_bounds = array<i64: 8, 256>}, {pipeline_mode = #tpu.pipeline_mode<synchronous>, transform_indices = @transform_1, window_bounds = array<i64: 2, 8>}, {pipeline_mode = #tpu.pipeline_mode<synchronous>, transform_indices = @transform_2, window_bounds = array<i64: 8, 4>}, {transform_indices = @transform_3, window_bounds = array<i64: 2, 4>}]} {
    %c0_i32 = arith.constant 0 : i32
    %0 = arith.cmpi eq, %arg1, %c0_i32 : i32
    %1 = arith.extui %0 : i1 to i32
    %c0_i32_0 = arith.constant 0 : i32
    %2 = arith.cmpi ne, %1, %c0_i32_0 : i32
    scf.if %2 {
      %cst_9 = arith.constant 0.000000e+00 : f32
      %14 = vector.broadcast %cst_9 : f32 to vector<8x128xf32>
      %c0_10 = arith.constant 0 : index
      %c0_11 = arith.constant 0 : index
      %15 = vector.load %arg6[%c0_10, %c0_11] : memref<8x128xf32, #tpu.memory_space<vmem>>, vector<8x128xf32>
      tpu.vector_store %arg6[%c0_10, %c0_11], %14 {strides = array<i32>} : memref<8x128xf32, #tpu.memory_space<vmem>>, vector<8x128xf32>,
    } else {
    }
    %cst = arith.constant 0.000000e+00 : f32
    %3 = vector.broadcast %cst : f32 to vector<8x128xf32>
    %c0 = arith.constant 0 : index
    %c0_1 = arith.constant 0 : index
    %4 = vector.load %arg2[%c0, %c0_1] : memref<8x256xf32, #tpu.memory_space<vmem>>, vector<8x128xf32>
    %5 = arith.addf %3, %4 : vector<8x128xf32>
    %c0_2 = arith.constant 0 : index
    %c128 = arith.constant 128 : index
    %6 = vector.load %arg2[%c0_2, %c128] : memref<8x256xf32, #tpu.memory_space<vmem>>, vector<8x128xf32>
    %7 = arith.addf %5, %6 : vector<8x128xf32>
    %c0_3 = arith.constant 0 : index
    %c0_4 = arith.constant 0 : index
    %8 = vector.load %arg6[%c0_3, %c0_4] : memref<8x128xf32, #tpu.memory_space<vmem>>, vector<8x128xf32>
    %9 = arith.addf %8, %7 : vector<8x128xf32>
    %c0_5 = arith.constant 0 : index
    %c0_6 = arith.constant 0 : index
    %10 = vector.load %arg6[%c0_5, %c0_6] : memref<8x128xf32, #tpu.memory_space<vmem>>, vector<8x128xf32>
    tpu.vector_store %arg6[%c0_5, %c0_6], %9 {strides = array<i32>} : memref<8x128xf32, #tpu.memory_space<vmem>>, vector<8x128xf32>,
    %c0_i32_7 = arith.constant 0 : i32
    %11 = arith.cmpi eq, %arg1, %c0_i32_7 : i32
    %12 = arith.extui %11 : i1 to i32
    %c0_i32_8 = arith.constant 0 : i32
    %13 = arith.cmpi ne, %12, %c0_i32_8 : i32
    scf.if %13 {
      %c0_9 = arith.constant 0 : index
      %c0_10 = arith.constant 0 : index
      %14 = vector.load %arg6[%c0_9, %c0_10] : memref<8x128xf32, #tpu.memory_space<vmem>>, vector<8x128xf32>
      %cst_11 = arith.constant dense<0.000000e+00> : vector<8xf32>
      %15 = vector.multi_reduction <add>, %14, %cst_11 [1] : vector<8x128xf32> to vector<8xf32>
      %16 = vector.shape_cast %15 : vector<8xf32> to vector<8x1xf32>
      %c0_12 = arith.constant 0 : index
      %c0_13 = arith.constant 0 : index
      %17 = vector.load %arg4[%c0_12, %c0_13] : memref<8x4xf32, #tpu.memory_space<vmem>>, vector<8x4xf32>
      %18 = vector.broadcast %16 : vector<8x1xf32> to vector<8x4xf32>
      %19 = arith.mulf %18, %17 : vector<8x4xf32>
      %c0_14 = arith.constant 0 : index
      %c0_15 = arith.constant 0 : index
      %20 = vector.load %arg3[%c0_14, %c0_15] : memref<2x8xf32, #tpu.memory_space<vmem>>, vector<2x8xf32>
      %cst_16 = arith.constant dense<0.000000e+00> : vector<2x4xf32>
      %21 = tpu.matmul %20, %19, %cst_16 {dimension_numbers = #tpu.dot_dimension_numbers<[1], [0], [0], [1], [0, 0, 1, 1], [], []>} : vector<2x8xf32>, vector<8x4xf32>, vector<2x4xf32> -> vector<2x4xf32>
      %22 = arith.negf %21 : vector<2x4xf32>
      %23 = math.exp %22 : vector<2x4xf32>
      %cst_17 = arith.constant 1.000000e+00 : f32
      %24 = vector.broadcast %cst_17 : f32 to vector<2x4xf32>
      %25 = arith.addf %24, %23 : vector<2x4xf32>
      %26 = arith.divf %24, %25 : vector<2x4xf32>
      %c0_18 = arith.constant 0 : index
      %c0_19 = arith.constant 0 : index
      %27 = vector.load %arg5[%c0_18, %c0_19] : memref<2x4xf32, #tpu.memory_space<vmem>>, vector<2x4xf32>
      tpu.vector_store %arg5[%c0_18, %c0_19], %26 {strides = array<i32>} : memref<2x4xf32, #tpu.memory_space<vmem>>, vector<2x4xf32>,
    } else {
    }
    return
  }
  func.func @transform_0(%arg0: i32, %arg1: i32) -> (i32, i32) {
    %c0_i32 = arith.constant 0 : i32
    return %arg0, %arg1 : i32, i32
  }
  func.func @transform_1(%arg0: i32, %arg1: i32) -> (i32, i32) {
    %c0_i32 = arith.constant 0 : i32
    %c0_i32_0 = arith.constant 0 : i32
    %c0_i32_1 = arith.constant 0 : i32
    return %c0_i32, %c0_i32_0 : i32, i32
  }
  func.func @transform_2(%arg0: i32, %arg1: i32) -> (i32, i32) {
    %c0_i32 = arith.constant 0 : i32
    %c0_i32_0 = arith.constant 0 : i32
    %c0_i32_1 = arith.constant 0 : i32
    return %c0_i32, %c0_i32_0 : i32, i32
  }
  func.func @transform_3(%arg0: i32, %arg1: i32) -> (i32, i32) {
    %c0_i32 = arith.constant 0 : i32
    %c0_i32_0 = arith.constant 0 : i32
    return %arg0, %c0_i32 : i32, i32
  }
}

</mosaic_0001>

<llo_original>
// kernel: tpu_custom_call.1
$region0: #{tpu_custom_call.1}
  #allocation0 [shape = 'u32[]', space=smem, size = 0x4, offset = 0x4, fixed_abs, tag = 'smem constant byte address 0x4 - core index']
  #allocation1 [shape = 'u32[144,128]{1,0:T(1,128)}', space=vmem, size = 0x12000, scoped, tag = 'internal scratch']
  #allocation2 [shape = 'f32[8,128]{1,0:T(8,128)}', space=vmem, size = 0x1000, scoped, tag = 'scratch operand']
  %s0 = inlined_call_operand.hbm [shape: f32[8,256], index: 0, kind: input, shape index: {}]
  %s1 = inlined_call_operand.vmem [shape: f32[2,8], index: 1, kind: input, shape index: {}]
  %s2 = inlined_call_operand.vmem [shape: f32[8,4], index: 2, kind: input, shape index: {}]
  %s3 = inlined_call_operand.hbm [shape: f32[2,4], index: 3, kind: output, shape index: {}]
  %s4 = sld [smem:[#allocation0]]
  $region34: #{tpu_custom_call.1} parent=0
    _
  %s6 = ssub.s32 1, %s4
  %s7 = scalar_select 0, %s6, %s4
  $region1: #{tpu_custom_call.1} parent=0
    #allocation3 [shape = 'u8[8192]{0}', space=vmem, size = 0x2000, scoped, tag = 'input window, operand 0, single buffered']
    #allocation4 [shape = 's32[1]{0}', space=sflag, size = 0x4, scoped, tag = 'scoped memory for tpu_custom_call.1']
    #allocation5 [shape = 's32[1]{0}', space=sflag, size = 0x4, scoped, tag = 'scoped memory for tpu_custom_call.1']
    #allocation6 [shape = 'u8[1024]{0}', space=vmem, size = 0x400, scoped, tag = 'output window, operand 0, single buffered']
    %8 = vsyncpa [#allocation4], 0
    %9 = vsyncpa [#allocation5], 0
    // Predicated region
    $region2: #{tpu_custom_call.1} parent=1 // pred_check
      _
    $region3: #{tpu_custom_call.1} parent=1 // pred_check_branch
      %11 = sbr.rel (0) target = $region5
    $region4: #{tpu_custom_call.1} parent=1 // pred_region
      %s13 = ssub.s32 256, 256
      %14 = vsyncadd [#allocation4], %s13
      %s16 = sshll.u32 [#allocation3], 4
      %s17 = int_to_ptr.vmem [resolvable:$true] %s16
      %19 = dma.hbm_to_vmem [thread:$0]  %s0, 256, %s17, [#allocation4]
    $region5: #{tpu_custom_call.1} parent=1 // pred_fallthru
      _
    // Predicated region
    $region6: #{tpu_custom_call.1} parent=1 // pred_check
      _
    $region7: #{tpu_custom_call.1} parent=1 // pred_check_branch
      %21 = sbr.rel (0) target = $region9
    $region8: #{tpu_custom_call.1} parent=1 // pred_region
      _
    $region9: #{tpu_custom_call.1} parent=1 // pred_fallthru
      _
    // Predicated region
    $region10: #{tpu_custom_call.1} parent=1 // pred_check
      _
    $region11: #{tpu_custom_call.1} parent=1 // pred_check_branch
      %23 = sbr.rel (0) target = $region13
    $region12: #{tpu_custom_call.1} parent=1 // pred_region
      _
    $region13: #{tpu_custom_call.1} parent=1 // pred_fallthru
      _
    // Predicated region
    $region14: #{tpu_custom_call.1} parent=1 // pred_check
      _
    $region15: #{tpu_custom_call.1} parent=1 // pred_check_branch
      %25 = sbr.rel (0) target = $region17
    $region16: #{tpu_custom_call.1} parent=1 // pred_region
      %26 = dma.done [#allocation4], 256
    $region17: #{tpu_custom_call.1} parent=1 // pred_fallthru
      _
    %p27 = scmp.eq.s32.totalorder 0, 0
    // Predicated region
    $region18: #{tpu_custom_call.1} parent=1 // pred_check
      %p28 = pneg %p27
    $region19: #{tpu_custom_call.1} parent=1 // pred_check_branch
      %30 = sbr.rel (%p28) target = $region21
    $region20: #{tpu_custom_call.1} parent=1 // pred_region
      %31 = vst [vmem:[#allocation2] sm:$0xff] 0.0
    $region21: #{tpu_custom_call.1} parent=1 // pred_fallthru
      _
    %v32 = vld [vmem:[#allocation3] sm:$0xff]
    %v33 = vadd.f32 %v32, 0.0
    %v34 = vld [vmem:[#allocation3 + $0x8] sm:$0xff]
    %v35 = vadd.f32 %v33, %v34
    %v36 = vld [vmem:[#allocation2] sm:$0xff]
    %v37 = vadd.f32 %v36, %v35
    %38 = vst [vmem:[#allocation2] sm:$0xff] %v37
    // Predicated region
    $region22: #{tpu_custom_call.1} parent=1 // pred_check
      %p39 = pneg %p27
    $region23: #{tpu_custom_call.1} parent=1 // pred_check_branch
      %41 = sbr.rel (%p39) target = $region25
    $region24: #{tpu_custom_call.1} parent=1 // pred_region
      %v42 = vld [vmem:[#allocation2] sm:$0xff]
      %43 = vadd.xlane.f32.xlu0 %v42
      %v44 = vpop.xlane.xlu0 %43
      %v45 = vld [vmem:[%s2] sm:$0xff]
      %v46 = vmul.f32 %v44, %v45
      %v47 = vld [vmem:[%s1] sm:$0x3]
      %vm48 = vcmask 64512
      %v50 = vsel %vm48, %v47, 0
      %52 = vmatprep.subr.mxu0 0.0
      %53 = vmatpush1.msra.mxu0 %v46
      %54 = vmatprep.subr.mxu0 0.0
      %55 = vmatpush1.msra.mxu0 0.0
      %56 = vmatprep.subr.mxu0 0.0
      %57 = vmatpush1.msra.mxu0 0.0
      %58 = vmatprep.subr.mxu0 0.0
      %59 = vmatpush1.msra.mxu0 0.0
      %60 = vmatprep.subr.mxu0 0.0
      %61 = vmatpush1.msra.mxu0 0.0
      %62 = vmatprep.subr.mxu0 0.0
      %63 = vmatpush1.msra.mxu0 0.0
      %64 = vmatprep.subr.mxu0 0.0
      %65 = vmatpush1.msra.mxu0 0.0
      %66 = vmatprep.subr.mxu0 0.0
      %67 = vmatpush1.msra.mxu0 0.0
      %68 = vmatprep.subr.mxu0 0.0
      %69 = vmatpush1.msra.mxu0 0.0
      %70 = vmatprep.subr.mxu0 0.0
      %71 = vmatpush1.msra.mxu0 0.0
      %72 = vmatprep.subr.mxu0 0.0
      %73 = vmatpush1.msra.mxu0 0.0
      %74 = vmatprep.subr.mxu0 0.0
      %75 = vmatpush1.msra.mxu0 0.0
      %76 = vmatprep.subr.mxu0 0.0
      %77 = vmatpush1.msra.mxu0 0.0
      %78 = vmatprep.subr.mxu0 0.0
      %79 = vmatpush1.msra.mxu0 0.0
      %80 = vmatprep.subr.mxu0 0.0
      %81 = vmatpush1.msra.mxu0 0.0
      %82 = vmatprep.subr.mxu0 0.0
      %83 = vmatpush1.msra.mxu0 0.0
      %84 = vmatprep.subr.mxu0 0.0
      %85 = vmatpush1.msra.mxu0 0.0
      %86 = vmatprep.subr.mxu0 0.0
      %87 = vmatpush1.msra.mxu0 0.0
      %88 = vmatprep.subr.mxu0 0.0
      %89 = vmatpush1.msra.mxu0 0.0
      %90 = vmatprep.subr.mxu0 0.0
      %91 = vmatpush1.msra.mxu0 0.0
      %92 = vmatprep.subr.mxu0 0.0
      %93 = vmatpush1.msra.mxu0 0.0
      %94 = vmatprep.subr.mxu0 0.0
      %95 = vmatpush1.msra.mxu0 0.0
      %96 = vmatprep.subr.mxu0 0.0
      %97 = vmatpush1.msra.mxu0 0.0
      %98 = vmatprep.subr.mxu0 0.0
      %99 = vmatpush1.msra.mxu0 0.0
      %100 = vmatprep.subr.mxu0 0.0
      %101 = vmatpush1.msra.mxu0 0.0
      %102 = vmatprep.subr.mxu0 0.0
      %103 = vmatpush1.msra.mxu0 0.0
      %104 = vmatprep.subr.mxu0 0.0
      %105 = vmatpush1.msra.mxu0 0.0
      %106 = vmatprep.subr.mxu0 0.0
      %107 = vmatpush1.msra.mxu0 0.0
      %108 = vmatprep.subr.mxu0 0.0
      %109 = vmatpush1.msra.mxu0 0.0
      %110 = vmatprep.subr.mxu0 0.0
      %111 = vmatpush1.msra.mxu0 0.0
      %112 = vmatprep.subr.mxu0 0.0
      %113 = vmatpush1.msra.mxu0 0.0
      %114 = vmatprep.subr.mxu0 0.0
      %115 = vmatpush1.msra.mxu0 0.0
      %116 = vmatprep.mubr.f32.mxu0 0.0
      %117 = vmatmul.mubr.f32.gmra.mrb[0].mxu0 %v50
      %v118 = vpop.f32.mrb[0].mxu0
      %v119 = vadd.f32 0.0, %v118
      %v120 = vpop.f32.mrb[0].mxu0
      %121 = vdwg.mxu0
      %v122 = vxor.u32 %v119, 2147483648
      %v123 = vmul.f32 %v122, 1.442695
      %v124 = vpow.pop %v123
      %v125 = vadd.f32 %v124, 1.0
      %v126 = vrcp.pop %v125
      %v127 = vmul.f32 1.0, %v126
      %vm128 = vcmask 25600
      %129 = vst.msk [vmem:[#allocation6] sm:$0x3] %vm128, %v127
    $region25: #{tpu_custom_call.1} parent=1 // pred_fallthru
      _
    // Predicated region
    $region26: #{tpu_custom_call.1} parent=1 // pred_check
      _
    $region27: #{tpu_custom_call.1} parent=1 // pred_check_branch
      %131 = sbr.rel (0) target = $region29
    $region28: #{tpu_custom_call.1} parent=1 // pred_region
      %s133 = ssub.s32 32, 32
      %134 = vsyncadd [#allocation5], %s133
      %s136 = sshll.u32 [#allocation6], 4
      %s137 = int_to_ptr.vmem [resolvable:$true] %s136
      %139 = dma.vmem_to_hbm [thread:$0]  %s137, 32, %s3, [#allocation5]
    $region29: #{tpu_custom_call.1} parent=1 // pred_fallthru
      _
    // Predicated region
    $region30: #{tpu_custom_call.1} parent=1 // pred_check
      _
    $region31: #{tpu_custom_call.1} parent=1 // pred_check_branch
      %141 = sbr.rel (0) target = $region33
    $region32: #{tpu_custom_call.1} parent=1 // pred_region
      %142 = dma.done [#allocation5], 32
    $region33: #{tpu_custom_call.1} parent=1 // pred_fallthru
      _
    %143 = vsyncpa [#allocation4], 1
    %144 = vsyncpa [#allocation5], 1

</llo_original>
